<compile_context>
chip_gen: v5e
topology: v5e:2x2
jax: 0.10.0
libtpu: 0.0.40
codegen_flags: <defaults>
</compile_context>

<pallas_src>
import functools

import jax
import jax.numpy as jnp
from jax.experimental import pallas as pl
from jax.experimental.pallas import tpu as pltpu


def _round_up(v, m):
    return (v + m - 1) // m * m


def _pairwise_kernel(mt_ref, o_ref, *, n_tiles, tile, out_sub, kernel_dims):
    """mt_ref: (n_tiles, kernel_dims*out_sub, tile)  f32, batch on lanes.
       o_ref : (1, out_sub, tile)                    f32, feat^T block for this i-tile."""
    it = pl.program_id(0)
    mi = mt_ref[it]                                   # (kd*out8, TILE)  i-tile

    def j_tile_body(jt, acc):
        mj0 = mt_ref[jt]                              # (kd*out8, TILE)  j-tile

        def step_body(_, carry):
            acc_in, mj = carry
            # L1 distance over kernel_dims: exact-f32 adds over 8-aligned
            # sublane slices (groups of out_sub rows).  Keeps everything on
            # the VPU, no MXU, no precision loss.
            l1 = jnp.abs(mi[0:out_sub] - mj[0:out_sub])
            for k in range(1, kernel_dims):
                lo = k * out_sub
                l1 = l1 + jnp.abs(mi[lo:lo + out_sub] - mj[lo:lo + out_sub])
            acc_out = acc_in + jnp.exp(-l1)           # (out8, TILE), dense exp
            # Lane roll by 1 (XLU, free slot): after s steps lane p of mj holds
            # batch element jt*tile + ((p - s) mod tile), so the s-loop visits
            # every j in this tile exactly once for every i lane.
            return acc_out, pltpu.roll(mj, shift=1, axis=1)

        acc, _ = jax.lax.fori_loop(0, tile, step_body, (acc, mj0))
        return acc

    acc0 = jnp.zeros((out_sub, tile), dtype=jnp.float32)
    acc = jax.lax.fori_loop(0, n_tiles, j_tile_body, acc0)
    o_ref[0] = acc


def minibatch_discrimination(x, T, *, mean=False, tile=128):
    """x: (N, in_features) f32; T: (in_features, out_features, kernel_dims) f32."""
    n, in_features = x.shape
    t_in, out_features, kernel_dims = T.shape
    assert t_in == in_features

    bk = out_features * kernel_dims
    out8 = _round_up(out_features, 8)            # sublane-dense, NOT 128-padded
    ti = _round_up(max(tile, 128), 128)          # lane-dense i/j tile
    n_pad = _round_up(max(n, ti), ti)
    n_tiles = n_pad // ti

    # --- hoisted tiny matmul (negligible vs the O(N^2) pairwise part) -------
    m = jnp.dot(x.astype(jnp.float32),
                T.reshape(in_features, bk).astype(jnp.float32),
                preferred_element_type=jnp.float32)            # (n, out*kd)

    # --- build (n_tiles, kd*out8, ti): batch on lanes, (kd,out) on sublanes --
    big = 1e30   # padded batch rows -> L1 ~ kd*1e30 (finite) -> exp == 0
    m3 = m.reshape(n, out_features, kernel_dims)
    m3 = jnp.pad(m3, ((0, 0), (0, out8 - out_features), (0, 0)))
    m3 = jnp.pad(m3, ((0, n_pad - n), (0, 0), (0, 0)), constant_values=big)
    mt = jnp.transpose(m3, (2, 1, 0)).reshape(kernel_dims * out8, n_pad)
    mt = mt.reshape(kernel_dims * out8, n_tiles, ti).transpose(1, 0, 2)

    mt_bytes = mt.size * 4
    vmem_est = 2 * mt_bytes + 8 * kernel_dims * out8 * ti * 4 + (1 << 20)
    # TODO(synk): for very large n_pad * out * kd (vmem_est > 64 MiB, v7x VMEM)
    # fall back to a 2-D (i, j) grid with j-blocked DMA instead of resident M.
    vmem_limit = int(min(max(vmem_est, 8 << 20), 64 << 20))

    kernel = functools.partial(
        _pairwise_kernel, n_tiles=n_tiles, tile=ti,
        out_sub=out8, kernel_dims=kernel_dims)

    feat_t = pl.pallas_call(
        kernel,
        out_shape=jax.ShapeDtypeStruct((n_tiles, out8, ti), jnp.float32),
        grid_spec=pltpu.PrefetchScalarGridSpec(
            num_scalar_prefetch=0,
            grid=(n_tiles,),
            in_specs=[
                # Full M resident in VMEM; constant block index => one DMA.
                pl.BlockSpec((n_tiles, kernel_dims * out8, ti),
                             lambda i: (0, 0, 0)),
            ],
            out_specs=pl.BlockSpec((1, out8, ti), lambda i: (i, 0, 0)),
        ),
        compiler_params=pltpu.CompilerParams(
            dimension_semantics=("parallel",),
            vmem_limit_bytes=vmem_limit,
        ),
    )(mt)

    # (n_tiles, out8, ti) -> (n_pad, out8) -> drop batch / feature padding.
    feat = feat_t.transpose(0, 2, 1).reshape(n_pad, out8)[:n, :out_features]
    if mean:
        feat = feat / n          # hoisted mean-divide (no in-kernel scalar)
    return jnp.concatenate([x, feat.astype(x.dtype)], axis=1)


def _reference(x, T, mean=False):
    n, in_features = x.shape
    _, out_features, kernel_dims = T.shape
    m = jnp.dot(x.astype(jnp.float32),
                T.reshape(in_features, -1).astype(jnp.float32),
                preferred_element_type=jnp.float32)
    m = m.reshape(n, out_features, kernel_dims)
    diff = jnp.abs(m[None, :, :, :] - m[:, None, :, :]).sum(axis=3)
    e = jnp.exp(-diff)
    out = e.mean(axis=1) if mean else e.sum(axis=1)
    return jnp.concatenate([x, out], axis=1)


if __name__ == "__main__":
    # Small shapes consistent with the module's forward (x is 2-D: (N, in_features)).
    N = 8
    IN_FEATURES = 32
    OUT_FEATURES = 16
    KERNEL_DIMS = 8

    key = jax.random.PRNGKey(0)
    kx, kt = jax.random.split(key)
    x = jax.random.normal(kx, (N, IN_FEATURES), dtype=jnp.float32)
    # Deterministic "torch.randn"-style parameter init (scaled so pairwise L1
    # distances are O(1) and the exp terms are numerically non-trivial).
    T = 0.05 * jax.random.normal(kt, (IN_FEATURES, OUT_FEATURES, KERNEL_DIMS),
                                 dtype=jnp.float32)

    ok = True
    for mean_flag in (False, True):
        y = jax.block_until_ready(minibatch_discrimination(x, T, mean=mean_flag))
        y_ref = _reference(x, T, mean=mean_flag)
        assert y.shape == (N, IN_FEATURES + OUT_FEATURES)
        ok &= bool(jnp.allclose(y, y_ref, atol=1e-4, rtol=1e-4))
    assert ok, "mismatch vs reference"

    print("KERNEL_OK")
</pallas_src>

<mosaic_0001>
module attributes {stable_mosaic.version = 11 : i64} {
  func.func @_pairwise_kernel(%arg0: i32, %arg1: memref<1x128x128xf32, #tpu.memory_space<vmem>>, %arg2: memref<1x16x128xf32, #tpu.memory_space<vmem>>) attributes {dimension_semantics = [#tpu.dimension_semantics<parallel>], iteration_bounds = array<i64: 1>, scalar_prefetch = 0 : i64, scratch_operands = 0 : i64, tpu.core_type = #tpu.core_type<tc>, window_params = [{pipeline_mode = #tpu.pipeline_mode<synchronous>, transform_indices = @transform_0, window_bounds = array<i64: 1, 128, 128>}, {transform_indices = @transform_1, window_bounds = array<i64: 1, 16, 128>}]} {
    %0 = arith.index_cast %arg0 : i32 to index
    %c0 = arith.constant 0 : index
    %c0_0 = arith.constant 0 : index
    %1 = vector.load %arg1[%0, %c0, %c0_0] : memref<1x128x128xf32, #tpu.memory_space<vmem>>, vector<1x128x128xf32>
    %2 = vector.shape_cast %1 : vector<1x128x128xf32> to vector<128x128xf32>
    %cst = arith.constant 0.000000e+00 : f32
    %3 = vector.broadcast %cst : f32 to vector<16x128xf32>
    %c0_i32 = arith.constant 0 : i32
    %4 = arith.index_cast %c0_i32 : i32 to index
    %c0_1 = arith.constant 0 : index
    %c0_2 = arith.constant 0 : index
    %5 = vector.load %arg1[%4, %c0_1, %c0_2] : memref<1x128x128xf32, #tpu.memory_space<vmem>>, vector<1x128x128xf32>
    %6 = vector.shape_cast %5 : vector<1x128x128xf32> to vector<128x128xf32>
    %c0_i32_3 = arith.constant 0 : i32
    %c128_i32 = arith.constant 128 : i32
    %7 = arith.addi %c0_i32_3, %c128_i32 : i32
    %c1_i32 = arith.constant 1 : i32
    %8:2 = scf.for %arg3 = %c0_i32_3 to %7 step %c1_i32 iter_args(%arg4 = %3, %arg5 = %6) -> (vector<16x128xf32>, vector<128x128xf32>)  : i32 {
      %12 = vector.extract_strided_slice %2 {offsets = [0, 0], sizes = [16, 128], strides = [1, 1]} : vector<128x128xf32> to vector<16x128xf32>
      %13 = vector.extract_strided_slice %arg5 {offsets = [0, 0], sizes = [16, 128], strides = [1, 1]} : vector<128x128xf32> to vector<16x128xf32>
      %14 = arith.subf %12, %13 : vector<16x128xf32>
      %15 = math.absf %14 : vector<16x128xf32>
      %16 = vector.extract_strided_slice %2 {offsets = [16, 0], sizes = [16, 128], strides = [1, 1]} : vector<128x128xf32> to vector<16x128xf32>
      %17 = vector.extract_strided_slice %arg5 {offsets = [16, 0], sizes = [16, 128], strides = [1, 1]} : vector<128x128xf32> to vector<16x128xf32>
      %18 = arith.subf %16, %17 : vector<16x128xf32>
      %19 = math.absf %18 : vector<16x128xf32>
      %20 = arith.addf %15, %19 : vector<16x128xf32>
      %21 = vector.extract_strided_slice %2 {offsets = [32, 0], sizes = [16, 128], strides = [1, 1]} : vector<128x128xf32> to vector<16x128xf32>
      %22 = vector.extract_strided_slice %arg5 {offsets = [32, 0], sizes = [16, 128], strides = [1, 1]} : vector<128x128xf32> to vector<16x128xf32>
      %23 = arith.subf %21, %22 : vector<16x128xf32>
      %24 = math.absf %23 : vector<16x128xf32>
      %25 = arith.addf %20, %24 : vector<16x128xf32>
      %26 = vector.extract_strided_slice %2 {offsets = [48, 0], sizes = [16, 128], strides = [1, 1]} : vector<128x128xf32> to vector<16x128xf32>
      %27 = vector.extract_strided_slice %arg5 {offsets = [48, 0], sizes = [16, 128], strides = [1, 1]} : vector<128x128xf32> to vector<16x128xf32>
      %28 = arith.subf %26, %27 : vector<16x128xf32>
      %29 = math.absf %28 : vector<16x128xf32>
      %30 = arith.addf %25, %29 : vector<16x128xf32>
      %31 = vector.extract_strided_slice %2 {offsets = [64, 0], sizes = [16, 128], strides = [1, 1]} : vector<128x128xf32> to vector<16x128xf32>
      %32 = vector.extract_strided_slice %arg5 {offsets = [64, 0], sizes = [16, 128], strides = [1, 1]} : vector<128x128xf32> to vector<16x128xf32>
      %33 = arith.subf %31, %32 : vector<16x128xf32>
      %34 = math.absf %33 : vector<16x128xf32>
      %35 = arith.addf %30, %34 : vector<16x128xf32>
      %36 = vector.extract_strided_slice %2 {offsets = [80, 0], sizes = [16, 128], strides = [1, 1]} : vector<128x128xf32> to vector<16x128xf32>
      %37 = vector.extract_strided_slice %arg5 {offsets = [80, 0], sizes = [16, 128], strides = [1, 1]} : vector<128x128xf32> to vector<16x128xf32>
      %38 = arith.subf %36, %37 : vector<16x128xf32>
      %39 = math.absf %38 : vector<16x128xf32>
      %40 = arith.addf %35, %39 : vector<16x128xf32>
      %41 = vector.extract_strided_slice %2 {offsets = [96, 0], sizes = [16, 128], strides = [1, 1]} : vector<128x128xf32> to vector<16x128xf32>
      %42 = vector.extract_strided_slice %arg5 {offsets = [96, 0], sizes = [16, 128], strides = [1, 1]} : vector<128x128xf32> to vector<16x128xf32>
      %43 = arith.subf %41, %42 : vector<16x128xf32>
      %44 = math.absf %43 : vector<16x128xf32>
      %45 = arith.addf %40, %44 : vector<16x128xf32>
      %46 = vector.extract_strided_slice %2 {offsets = [112, 0], sizes = [16, 128], strides = [1, 1]} : vector<128x128xf32> to vector<16x128xf32>
      %47 = vector.extract_strided_slice %arg5 {offsets = [112, 0], sizes = [16, 128], strides = [1, 1]} : vector<128x128xf32> to vector<16x128xf32>
      %48 = arith.subf %46, %47 : vector<16x128xf32>
      %49 = math.absf %48 : vector<16x128xf32>
      %50 = arith.addf %45, %49 : vector<16x128xf32>
      %cst_8 = arith.constant 0.000000e+00 : f32
      %51 = vector.broadcast %cst_8 : f32 to vector<16x128xf32>
      %52 = arith.subf %51, %50 : vector<16x128xf32>
      %53 = math.exp %52 : vector<16x128xf32>
      %54 = arith.addf %arg4, %53 : vector<16x128xf32>
      %c1_i32_9 = arith.constant 1 : i32
      %55 = tpu.dynamic_rotate %arg5 by %c1_i32_9 dim 1 : vector<128x128xf32>, i32 -> vector<128x128xf32>
      scf.yield %54, %55 : vector<16x128xf32>, vector<128x128xf32>
    }
    %c1_i32_4 = arith.constant 1 : i32
    %c0_5 = arith.constant 0 : index
    %c0_6 = arith.constant 0 : index
    %c0_7 = arith.constant 0 : index
    %9 = vector.load %arg2[%c0_5, %c0_6, %c0_7] : memref<1x16x128xf32, #tpu.memory_space<vmem>>, vector<1x16x128xf32>
    %10 = vector.shape_cast %9 : vector<1x16x128xf32> to vector<16x128xf32>
    %11 = vector.shape_cast %8#0 : vector<16x128xf32> to vector<1x16x128xf32>
    tpu.vector_store %arg2[%c0_5, %c0_6, %c0_7], %11 {strides = array<i32>} : memref<1x16x128xf32, #tpu.memory_space<vmem>>, vector<1x16x128xf32>,
    return
  }
  func.func @transform_0(%arg0: i32) -> (i32, i32, i32) {
    %c0_i32 = arith.constant 0 : i32
    %c0_i32_0 = arith.constant 0 : i32
    %c0_i32_1 = arith.constant 0 : i32
    %c0_i32_2 = arith.constant 0 : i32
    return %c0_i32, %c0_i32_0, %c0_i32_1 : i32, i32, i32
  }
  func.func @transform_1(%arg0: i32) -> (i32, i32, i32) {
    %c0_i32 = arith.constant 0 : i32
    %c0_i32_0 = arith.constant 0 : i32
    %c0_i32_1 = arith.constant 0 : i32
    return %arg0, %c0_i32, %c0_i32_0 : i32, i32, i32
  }
}

</mosaic_0001>

<llo_original>
// kernel: tpu_custom_call.1
$region0: #{tpu_custom_call.1}
  #allocation0 [shape = 'u32[]', space=smem, size = 0x4, offset = 0x4, fixed_abs, tag = 'smem constant byte address 0x4 - core index']
  #allocation1 [shape = 'u32[72,128]{1,0:T(1,128)}', space=vmem, size = 0x9000, scoped, tag = 'internal scratch']
  %s0 = inlined_call_operand.hbm [shape: f32[1,128,128], index: 0, kind: input, shape index: {}]
  %s1 = inlined_call_operand.hbm [shape: f32[1,16,128], index: 1, kind: output, shape index: {}]
  %s2 = sld [smem:[#allocation0]]
  $region25: #{tpu_custom_call.1} parent=0
    _
  %s4 = ssub.s32 1, %s2
  %s5 = scalar_select 0, %s4, %s2
  $region1: #{tpu_custom_call.1} parent=0
    #allocation2 [shape = 'u8[65536]{0}', space=vmem, size = 0x10000, scoped, tag = 'input window, operand 0, single buffered']
    #allocation3 [shape = 's32[1]{0}', space=sflag, size = 0x4, scoped, tag = 'scoped memory for tpu_custom_call.1']
    #allocation4 [shape = 's32[1]{0}', space=sflag, size = 0x4, scoped, tag = 'scoped memory for tpu_custom_call.1']
    #allocation5 [shape = 'u8[8192]{0}', space=vmem, size = 0x2000, scoped, tag = 'output window, operand 0, single buffered']
    %6 = vsyncpa [#allocation3], 0
    %7 = vsyncpa [#allocation4], 0
    // Predicated region
    $region2: #{tpu_custom_call.1} parent=1 // pred_check
      _
    $region3: #{tpu_custom_call.1} parent=1 // pred_check_branch
      %9 = sbr.rel (0) target = $region5
    $region4: #{tpu_custom_call.1} parent=1 // pred_region
      %11 = vsyncadd [#allocation3], 0
      %s12 = sshll.u32 %s0, 4
      %s13 = int_to_ptr.hbm [resolvable:$true] %s12
      %s14 = sshll.u32 [#allocation2], 4
      %s15 = int_to_ptr.vmem [resolvable:$true] %s14
      %20 = dma.hbm_to_vmem [thread:$0]  %s13, 2048, %s15, [#allocation3], 128, 128, 8
    $region5: #{tpu_custom_call.1} parent=1 // pred_fallthru
      _
    // Predicated region
    $region6: #{tpu_custom_call.1} parent=1 // pred_check
      _
    $region7: #{tpu_custom_call.1} parent=1 // pred_check_branch
      %22 = sbr.rel (0) target = $region9
    $region8: #{tpu_custom_call.1} parent=1 // pred_region
      %24 = dma.done [#allocation3], 2048
    $region9: #{tpu_custom_call.1} parent=1 // pred_fallthru
      _
    %s25 = smul.u32 0, 128
    %s26 = scalar_lea.vmem [#allocation2], %s25
    %v27 = vld [vmem:[%s26] sm:$0xff]
    %v28 = vld [vmem:[%s26 + $0x8] sm:$0xff]
    %v29 = vld [vmem:[%s26 + $0x10] sm:$0xff]
    %v30 = vld [vmem:[%s26 + $0x18] sm:$0xff]
    %v31 = vld [vmem:[%s26 + $0x20] sm:$0xff]
    %v32 = vld [vmem:[%s26 + $0x28] sm:$0xff]
    %v33 = vld [vmem:[%s26 + $0x30] sm:$0xff]
    %v34 = vld [vmem:[%s26 + $0x38] sm:$0xff]
    %v35 = vld [vmem:[%s26 + $0x40] sm:$0xff]
    %v36 = vld [vmem:[%s26 + $0x48] sm:$0xff]
    %v37 = vld [vmem:[%s26 + $0x50] sm:$0xff]
    %v38 = vld [vmem:[%s26 + $0x58] sm:$0xff]
    %v39 = vld [vmem:[%s26 + $0x60] sm:$0xff]
    %v40 = vld [vmem:[%s26 + $0x68] sm:$0xff]
    %v41 = vld [vmem:[%s26 + $0x70] sm:$0xff]
    %v42 = vld [vmem:[%s26 + $0x78] sm:$0xff]
    %v43 = vld [vmem:[#allocation2] sm:$0xff]
    %v44 = vld [vmem:[#allocation2 + $0x8] sm:$0xff]
    %v45 = vld [vmem:[#allocation2 + $0x10] sm:$0xff]
    %v46 = vld [vmem:[#allocation2 + $0x18] sm:$0xff]
    %v47 = vld [vmem:[#allocation2 + $0x20] sm:$0xff]
    %v48 = vld [vmem:[#allocation2 + $0x28] sm:$0xff]
    %v49 = vld [vmem:[#allocation2 + $0x30] sm:$0xff]
    %v50 = vld [vmem:[#allocation2 + $0x38] sm:$0xff]
    %v51 = vld [vmem:[#allocation2 + $0x40] sm:$0xff]
    %v52 = vld [vmem:[#allocation2 + $0x48] sm:$0xff]
    %v53 = vld [vmem:[#allocation2 + $0x50] sm:$0xff]
    %v54 = vld [vmem:[#allocation2 + $0x58] sm:$0xff]
    %v55 = vld [vmem:[#allocation2 + $0x60] sm:$0xff]
    %v56 = vld [vmem:[#allocation2 + $0x68] sm:$0xff]
    %v57 = vld [vmem:[#allocation2 + $0x70] sm:$0xff]
    %v58 = vld [vmem:[#allocation2 + $0x78] sm:$0xff]
    loop: start=0, step=1, limit=128
    $region10: #{tpu_custom_call.1} parent=1 // loop_pre_header
      _
    $region11: #{tpu_custom_call.1} parent=1 // loop_header
      %s60 = sphi 0, %s64
      %p61 = scmp.ge.s32.totalorder %s60, 128
      %v65 = vphi 0.0, %v135
      %v66 = vphi 0.0, %v136
      %v67 = vphi %v43, %v138
      %v68 = vphi %v44, %v140
      %v69 = vphi %v45, %v142
      %v70 = vphi %v46, %v144
      %v71 = vphi %v47, %v146
      %v72 = vphi %v48, %v148
      %v73 = vphi %v49, %v150
      %v74 = vphi %v50, %v152
      %v75 = vphi %v51, %v154
      %v76 = vphi %v52, %v156
      %v77 = vphi %v53, %v158
      %v78 = vphi %v54, %v160
      %v79 = vphi %v55, %v162
      %v80 = vphi %v56, %v164
      %v81 = vphi %v57, %v166
      %v82 = vphi %v58, %v168
    $region12: #{tpu_custom_call.1} parent=1 // loop_header_branch
      %63 = sbr.rel (%p61) target = $region16
    $region13: #{tpu_custom_call.1} parent=1 // loop_body
      %v83 = vsub.f32 %v27, %v67
      %v84 = vsub.f32 %v28, %v68
      %v85 = vand.u32 2147483647, %v83
      %v86 = vand.u32 2147483647, %v84
      %v87 = vsub.f32 %v29, %v69
      %v88 = vsub.f32 %v30, %v70
      %v89 = vand.u32 2147483647, %v87
      %v90 = vand.u32 2147483647, %v88
      %v91 = vadd.f32 %v85, %v89
      %v92 = vadd.f32 %v86, %v90
      %v93 = vsub.f32 %v31, %v71
      %v94 = vsub.f32 %v32, %v72
      %v95 = vand.u32 2147483647, %v93
      %v96 = vand.u32 2147483647, %v94
      %v97 = vadd.f32 %v91, %v95
      %v98 = vadd.f32 %v92, %v96
      %v99 = vsub.f32 %v33, %v73
      %v100 = vsub.f32 %v34, %v74
      %v101 = vand.u32 2147483647, %v99
      %v102 = vand.u32 2147483647, %v100
      %v103 = vadd.f32 %v97, %v101
      %v104 = vadd.f32 %v98, %v102
      %v105 = vsub.f32 %v35, %v75
      %v106 = vsub.f32 %v36, %v76
      %v107 = vand.u32 2147483647, %v105
      %v108 = vand.u32 2147483647, %v106
      %v109 = vadd.f32 %v103, %v107
      %v110 = vadd.f32 %v104, %v108
      %v111 = vsub.f32 %v37, %v77
      %v112 = vsub.f32 %v38, %v78
      %v113 = vand.u32 2147483647, %v111
      %v114 = vand.u32 2147483647, %v112
      %v115 = vadd.f32 %v109, %v113
      %v116 = vadd.f32 %v110, %v114
      %v117 = vsub.f32 %v39, %v79
      %v118 = vsub.f32 %v40, %v80
      %v119 = vand.u32 2147483647, %v117
      %v120 = vand.u32 2147483647, %v118
      %v121 = vadd.f32 %v115, %v119
      %v122 = vadd.f32 %v116, %v120
      %v123 = vsub.f32 %v41, %v81
      %v124 = vsub.f32 %v42, %v82
      %v125 = vand.u32 2147483647, %v123
      %v126 = vand.u32 2147483647, %v124
      %v127 = vadd.f32 %v121, %v125
      %v128 = vadd.f32 %v122, %v126
      %v129 = vsub.f32 0.0, %v127
      %v130 = vsub.f32 0.0, %v128
      %v131 = vmul.f32 %v129, 1.442695
      %v132 = vpow.pop %v131
      %v133 = vmul.f32 %v130, 1.442695
      %v134 = vpow.pop %v133
      %v135 = vadd.f32 %v65, %v132
      %v136 = vadd.f32 %v66, %v134
      %137 = vrot.lane.b32.xlu0 %v67, 1
      %v138 = vpop.permute.xlu0 %137
      %139 = vrot.lane.b32.xlu0 %v68, 1
      %v140 = vpop.permute.xlu0 %139
      %141 = vrot.lane.b32.xlu0 %v69, 1
      %v142 = vpop.permute.xlu0 %141
      %143 = vrot.lane.b32.xlu0 %v70, 1
      %v144 = vpop.permute.xlu0 %143
      %145 = vrot.lane.b32.xlu0 %v71, 1
      %v146 = vpop.permute.xlu0 %145
      %147 = vrot.lane.b32.xlu0 %v72, 1
      %v148 = vpop.permute.xlu0 %147
      %149 = vrot.lane.b32.xlu0 %v73, 1
      %v150 = vpop.permute.xlu0 %149
      %151 = vrot.lane.b32.xlu0 %v74, 1
      %v152 = vpop.permute.xlu0 %151
      %153 = vrot.lane.b32.xlu0 %v75, 1
      %v154 = vpop.permute.xlu0 %153
      %155 = vrot.lane.b32.xlu0 %v76, 1
      %v156 = vpop.permute.xlu0 %155
      %157 = vrot.lane.b32.xlu0 %v77, 1
      %v158 = vpop.permute.xlu0 %157
      %159 = vrot.lane.b32.xlu0 %v78, 1
      %v160 = vpop.permute.xlu0 %159
      %161 = vrot.lane.b32.xlu0 %v79, 1
      %v162 = vpop.permute.xlu0 %161
      %163 = vrot.lane.b32.xlu0 %v80, 1
      %v164 = vpop.permute.xlu0 %163
      %165 = vrot.lane.b32.xlu0 %v81, 1
      %v166 = vpop.permute.xlu0 %165
      %167 = vrot.lane.b32.xlu0 %v82, 1
      %v168 = vpop.permute.xlu0 %167
    $region14: #{tpu_custom_call.1} parent=1 // loop_footer
      %s64 = sadd.s32 1, %s60
    $region15: #{tpu_custom_call.1} parent=1 // loop_footer_branch
      %59 = sbr.rel target = $region11
    $region16: #{tpu_custom_call.1} parent=1 // loop_exit
      _
    %169 = vst [vmem:[#allocation5] sm:$0xff] %v65
    %170 = vst [vmem:[#allocation5 + $0x8] sm:$0xff] %v66
    // Predicated region
    $region17: #{tpu_custom_call.1} parent=1 // pred_check
      _
    $region18: #{tpu_custom_call.1} parent=1 // pred_check_branch
      %172 = sbr.rel (0) target = $region20
    $region19: #{tpu_custom_call.1} parent=1 // pred_region
      %174 = vsyncadd [#allocation4], 0
      %s175 = sshll.u32 [#allocation5], 4
      %s176 = int_to_ptr.vmem [resolvable:$true] %s175
      %s177 = sshll.u32 %s1, 4
      %s178 = int_to_ptr.hbm [resolvable:$true] %s177
      %183 = dma.vmem_to_hbm [thread:$0]  %s176, 256, %s178, [#allocation4], 128, 128, 8
    $region20: #{tpu_custom_call.1} parent=1 // pred_fallthru
      _
    // Predicated region
    $region21: #{tpu_custom_call.1} parent=1 // pred_check
      _
    $region22: #{tpu_custom_call.1} parent=1 // pred_check_branch
      %185 = sbr.rel (0) target = $region24
    $region23: #{tpu_custom_call.1} parent=1 // pred_region
      %187 = dma.done [#allocation4], 256
    $region24: #{tpu_custom_call.1} parent=1 // pred_fallthru
      _
    %188 = vsyncpa [#allocation3], 1
    %189 = vsyncpa [#allocation4], 1

</llo_original>
